<compile_context>
chip_gen: v5e
topology: v5e:2x2
jax: 0.10.0
libtpu: 0.0.40
codegen_flags: <defaults>
</compile_context>

<pallas_src>
import functools
import math

import jax
import jax.numpy as jnp
import numpy as np
from jax.experimental import pallas as pl
from jax.experimental.pallas import tpu as pltpu


# ----------------------------- tiling helpers -------------------------------

_VMEM_LIMIT = 32 * 1024 * 1024  # scoped VMEM budget the tile targets fit in


def _pick_tile(n, target, mult):
    """Largest tile <= target that divides n and is a multiple of `mult`.
    Falls back to the full extent (block == array dim is always legal)."""
    if n <= target:
        return n
    t = (min(target, n) // mult) * mult
    while t >= mult:
        if n % t == 0:
            return t
        t -= mult
    return n  # TODO(synk): pad ragged extents instead of falling back to full.


def _heads_per_block(num_heads, head_dim, target_lanes=512):
    """Divisor of num_heads whose lane width (hpb*head_dim) is a multiple of
    128 (lane-dense, unmasked stores) and <= target_lanes.  Falls back to all
    heads (block == full hidden dim, always legal)."""
    best = num_heads
    for hpb in range(1, num_heads + 1):
        if num_heads % hpb:
            continue
        width = hpb * head_dim
        if width % 128 == 0 and width <= max(target_lanes, 128):
            best = hpb
    return best


# ----------------------------- Pallas kernels -------------------------------

def _linear_kernel(x_ref, w_ref, b_ref, o_ref, acc_ref):
    """o = x @ w + b, accumulated over the K grid axis (axis 2)."""
    k = pl.program_id(2)

    @pl.when(k == 0)
    def _():
        acc_ref[...] = jnp.zeros_like(acc_ref)

    acc_ref[...] += jnp.dot(x_ref[...], w_ref[...],
                            preferred_element_type=jnp.float32)

    @pl.when(k == pl.num_programs(2) - 1)
    def _():
        o_ref[...] = (acc_ref[...] + b_ref[...]).astype(o_ref.dtype)


def _linear_rmsnorm_kernel(x_ref, w_ref, b_ref, g_ref, o_ref, acc_ref, *, eps):
    """o = RMSNorm(x @ w + b) * g.  N (=dim) stays un-tiled so the full-dim
    norm fuses into the K-loop finalize."""
    k = pl.program_id(1)

    @pl.when(k == 0)
    def _():
        acc_ref[...] = jnp.zeros_like(acc_ref)

    acc_ref[...] += jnp.dot(x_ref[...], w_ref[...],
                            preferred_element_type=jnp.float32)

    @pl.when(k == pl.num_programs(1) - 1)
    def _():
        h = acc_ref[...] + b_ref[...]
        ms = jnp.mean(h * h, axis=-1, keepdims=True)
        o_ref[...] = (h * jax.lax.rsqrt(ms + eps) * g_ref[...]).astype(o_ref.dtype)


def _linear_kv_rmsnorm_kernel(y_ref, w_ref, b_ref, g_ref, k_out_ref, v_out_ref,
                              acc_ref, *, eps, dim):
    """Fused K|V projection: one matmul against [Wk|Wv] (N = 2*dim); RMSNorm is
    applied to the K half only.  Two separate outputs (k, v) — no post-slice."""
    k = pl.program_id(1)

    @pl.when(k == 0)
    def _():
        acc_ref[...] = jnp.zeros_like(acc_ref)

    acc_ref[...] += jnp.dot(y_ref[...], w_ref[...],
                            preferred_element_type=jnp.float32)

    @pl.when(k == pl.num_programs(1) - 1)
    def _():
        h = acc_ref[...] + b_ref[...]
        hk = h[:, :dim]
        ms = jnp.mean(hk * hk, axis=-1, keepdims=True)
        k_out_ref[...] = (hk * jax.lax.rsqrt(ms + eps) * g_ref[...]).astype(
            k_out_ref.dtype)
        v_out_ref[...] = h[:, dim:].astype(v_out_ref.dtype)


def _flash_attn_kernel(q_ref, k_ref, v_ref, o_ref, m_sc, l_sc, acc_sc,
                       *, head_dim, scale, attn_dtype):
    """Online-softmax (flash) cross attention.  One grid step handles
    (batch b, head group hg, q tile, kv tile); the kv-tile axis is the
    innermost reduction axis.  Blocks are (1, tile, hpb*head_dim): heads stay
    packed along lanes, per-head views are 128-aligned static slices."""
    ki = pl.program_id(3)

    @pl.when(ki == 0)
    def _():
        m_sc[...] = jnp.full(m_sc.shape, -jnp.inf, m_sc.dtype)
        l_sc[...] = jnp.zeros_like(l_sc)
        acc_sc[...] = jnp.zeros_like(acc_sc)

    hpb = q_ref.shape[2] // head_dim

    qt = q_ref[0]
    if scale != 1.0:                      # scale usually folded into gq
        qt = qt * scale
    qt = qt.astype(attn_dtype)            # (tq, hpb*D)
    kt = k_ref[0].astype(attn_dtype)      # (tk, hpb*D)
    vt = v_ref[0].astype(attn_dtype)      # (tk, hpb*D)

    nt_dims = (((1,), (1,)), ((), ()))    # q @ k^T (contraction folded into MXU)
    nn_dims = (((1,), (0,)), ((), ()))    # p @ v

    for g in range(hpb):                  # static unroll over packed heads
        sl = slice(g * head_dim, (g + 1) * head_dim)
        s = jax.lax.dot_general(qt[:, sl], kt[:, sl], nt_dims,
                                preferred_element_type=jnp.float32)   # (tq, tk)
        m_prev = m_sc[g]
        m_new = jnp.maximum(m_prev, jnp.max(s, axis=-1, keepdims=True))
        alpha = jnp.exp(m_prev - m_new)
        p = jnp.exp(s - m_new)
        l_sc[g] = alpha * l_sc[g] + jnp.sum(p, axis=-1, keepdims=True)
        acc_sc[g] = alpha * acc_sc[g] + jax.lax.dot_general(
            p.astype(attn_dtype), vt[:, sl], nn_dims,
            preferred_element_type=jnp.float32)                       # (tq, D)
        m_sc[g] = m_new

    @pl.when(ki == pl.num_programs(3) - 1)
    def _():
        outs = [acc_sc[g] * pl.reciprocal(l_sc[g], approx=True)
                for g in range(hpb)]
        # single lane-dense (multiple-of-128-wide) store of the whole block
        o_ref[0] = jnp.concatenate(outs, axis=-1).astype(o_ref.dtype)


# ------------------------------ wrappers -------------------------------------

def pallas_linear(x2d, w_t, b_row, *, tm_target=256, tn_target=256,
                  tk_target=512):
    """x2d: (M, K); w_t: (K, N) pre-transposed at load time; b_row: (1, N)."""
    M, K = x2d.shape
    N = w_t.shape[1]
    tm = _pick_tile(M, tm_target, 8)
    tn = _pick_tile(N, tn_target, 128)
    tk = _pick_tile(K, tk_target, 128)
    grid = (M // tm, N // tn, K // tk)
    return pl.pallas_call(
        _linear_kernel,
        out_shape=jax.ShapeDtypeStruct((M, N), x2d.dtype),
        grid_spec=pltpu.PrefetchScalarGridSpec(
            num_scalar_prefetch=0,
            grid=grid,
            in_specs=[
                pl.BlockSpec((tm, tk), lambda i, j, k: (i, k)),
                pl.BlockSpec((tk, tn), lambda i, j, k: (k, j)),
                pl.BlockSpec((1, tn), lambda i, j, k: (0, j)),
            ],
            out_specs=pl.BlockSpec((tm, tn), lambda i, j, k: (i, j)),
            scratch_shapes=[pltpu.VMEM((tm, tn), jnp.float32)],
        ),
        compiler_params=pltpu.CompilerParams(
            dimension_semantics=("parallel", "parallel", "arbitrary"),
            vmem_limit_bytes=_VMEM_LIMIT,
        ),
    )(x2d, w_t, b_row)


def pallas_linear_rmsnorm(x2d, w_t, b_row, g_row, *, eps,
                          tm_target=128, tk_target=256):
    """RMSNorm(x @ w + b) * g with the norm fused into the K-loop finalize."""
    M, K = x2d.shape
    N = w_t.shape[1]
    tm = _pick_tile(M, tm_target, 8)
    tk = _pick_tile(K, tk_target, 128)
    grid = (M // tm, K // tk)
    return pl.pallas_call(
        functools.partial(_linear_rmsnorm_kernel, eps=eps),
        out_shape=jax.ShapeDtypeStruct((M, N), x2d.dtype),
        grid_spec=pltpu.PrefetchScalarGridSpec(
            num_scalar_prefetch=0,
            grid=grid,
            in_specs=[
                pl.BlockSpec((tm, tk), lambda i, k: (i, k)),
                pl.BlockSpec((tk, N), lambda i, k: (k, 0)),
                pl.BlockSpec((1, N), lambda i, k: (0, 0)),
                pl.BlockSpec((1, N), lambda i, k: (0, 0)),
            ],
            out_specs=pl.BlockSpec((tm, N), lambda i, k: (i, 0)),
            scratch_shapes=[pltpu.VMEM((tm, N), jnp.float32)],
        ),
        compiler_params=pltpu.CompilerParams(
            dimension_semantics=("parallel", "arbitrary"),
            vmem_limit_bytes=_VMEM_LIMIT,
        ),
    )(x2d, w_t, b_row, g_row)


def pallas_linear_kv_rmsnorm(y2d, wkv_t, bkv_row, gk_row, *, eps, dim,
                             tm_target=128, tk_target=128):
    """Fused K|V projection (one pass over y), returns (k, v) as (M, dim)."""
    M, K = y2d.shape
    N2 = wkv_t.shape[1]           # = 2*dim
    tm = _pick_tile(M, tm_target, 8)
    tk = _pick_tile(K, tk_target, 128)
    grid = (M // tm, K // tk)
    return pl.pallas_call(
        functools.partial(_linear_kv_rmsnorm_kernel, eps=eps, dim=dim),
        out_shape=(jax.ShapeDtypeStruct((M, dim), y2d.dtype),
                   jax.ShapeDtypeStruct((M, dim), y2d.dtype)),
        grid_spec=pltpu.PrefetchScalarGridSpec(
            num_scalar_prefetch=0,
            grid=grid,
            in_specs=[
                pl.BlockSpec((tm, tk), lambda i, k: (i, k)),
                pl.BlockSpec((tk, N2), lambda i, k: (k, 0)),
                pl.BlockSpec((1, N2), lambda i, k: (0, 0)),
                pl.BlockSpec((1, dim), lambda i, k: (0, 0)),
            ],
            out_specs=(pl.BlockSpec((tm, dim), lambda i, k: (i, 0)),
                       pl.BlockSpec((tm, dim), lambda i, k: (i, 0))),
            scratch_shapes=[pltpu.VMEM((tm, N2), jnp.float32)],
        ),
        compiler_params=pltpu.CompilerParams(
            dimension_semantics=("parallel", "arbitrary"),
            vmem_limit_bytes=_VMEM_LIMIT,
        ),
    )(y2d, wkv_t, bkv_row, gk_row)


def pallas_cross_attention(q, k, v, num_heads, *, scale=None,
                           tq_target=256, tkv_target=512,
                           attn_dtype=jnp.bfloat16):
    """q: (B, Sq, dim), k/v: (B, Sk, dim) -> (B, Sq, dim).  No key mask
    (matches the module's unmasked scaled_dot_product_attention)."""
    B, Sq, dim = q.shape
    Sk = k.shape[1]
    head_dim = dim // num_heads
    if scale is None:
        scale = 1.0 / math.sqrt(head_dim)

    hpb = _heads_per_block(num_heads, head_dim)
    n_hg = num_heads // hpb
    width = hpb * head_dim

    tq = _pick_tile(Sq, tq_target, 8)
    tk = _pick_tile(Sk, tkv_target, 128)
    grid = (B, n_hg, Sq // tq, Sk // tk)

    kern = functools.partial(_flash_attn_kernel, head_dim=head_dim,
                             scale=float(scale), attn_dtype=attn_dtype)
    return pl.pallas_call(
        kern,
        out_shape=jax.ShapeDtypeStruct((B, Sq, dim), q.dtype),
        grid_spec=pltpu.PrefetchScalarGridSpec(
            num_scalar_prefetch=0,
            grid=grid,
            in_specs=[
                pl.BlockSpec((1, tq, width), lambda b, hg, qi, ki: (b, qi, hg)),
                pl.BlockSpec((1, tk, width), lambda b, hg, qi, ki: (b, ki, hg)),
                pl.BlockSpec((1, tk, width), lambda b, hg, qi, ki: (b, ki, hg)),
            ],
            out_specs=pl.BlockSpec((1, tq, width),
                                   lambda b, hg, qi, ki: (b, qi, hg)),
            scratch_shapes=[
                pltpu.VMEM((hpb, tq, 1), jnp.float32),        # running max
                pltpu.VMEM((hpb, tq, 1), jnp.float32),        # running denom
                pltpu.VMEM((hpb, tq, head_dim), jnp.float32),  # running acc
            ],
        ),
        compiler_params=pltpu.CompilerParams(
            dimension_semantics=("parallel", "parallel", "parallel",
                                 "arbitrary"),
            vmem_limit_bytes=_VMEM_LIMIT,
        ),
    )(q, k, v)


# --------------------------- parameter prep / forward ------------------------

def prepare_params(raw, num_heads, eps=1e-6):
    """One-time (load-time) prep: transpose weights to (K, N), fuse Wk|Wv into
    a single (dim, 2*dim) matmul, fold 1/sqrt(head_dim) into the q-norm gain."""
    dim = raw["wq"].shape[0]
    head_dim = dim // num_heads
    q_scale = 1.0 / math.sqrt(head_dim)
    return {
        "dim": dim,
        "num_heads": num_heads,
        "eps": eps,
        "wq_t": raw["wq"].T,
        "bq": raw["bq"][None, :],
        "gq": (raw["gq"] * q_scale)[None, :],
        "wkv_t": jnp.concatenate([raw["wk"].T, raw["wv"].T], axis=1),
        "bkv": jnp.concatenate([raw["bk"], raw["bv"]])[None, :],
        "gk": raw["gk"][None, :],
        "wo_t": raw["wo"].T,
        "bo": raw["bo"][None, :],
    }


def cross_attention_forward(p, x, y, *, attn_dtype=jnp.bfloat16,
                            tkv_target=512):
    """has_image_input=False path of CrossAttention.forward."""
    # TODO(synk): has_image_input=True branch (extra k_img/v_img projections and
    # a second attention over y[:, :257]) is not implemented here.
    B, Sq, dim = x.shape
    Sk = y.shape[1]
    H = p["num_heads"]

    x2 = x.reshape(B * Sq, dim)
    y2 = y.reshape(B * Sk, dim)

    q2 = pallas_linear_rmsnorm(x2, p["wq_t"], p["bq"], p["gq"], eps=p["eps"])
    k2, v2 = pallas_linear_kv_rmsnorm(y2, p["wkv_t"], p["bkv"], p["gk"],
                                      eps=p["eps"], dim=dim)

    q = q2.reshape(B, Sq, dim)   # free reshapes; no head-split transposes
    k = k2.reshape(B, Sk, dim)
    v = v2.reshape(B, Sk, dim)

    # attention scale already folded into gq at prepare time -> scale=1.0
    attn = pallas_cross_attention(q, k, v, H, scale=1.0,
                                  attn_dtype=attn_dtype,
                                  tkv_target=tkv_target)

    out2 = pallas_linear(attn.reshape(B * Sq, dim), p["wo_t"], p["bo"])
    return out2.reshape(B, Sq, dim)


# ------------------------------ reference -------------------------------------

def _ref_forward(raw, x, y, num_heads, eps=1e-6):
    def linear(t, w, b):
        return t @ w.T + b

    def rmsnorm(t, g):
        ms = jnp.mean(t * t, axis=-1, keepdims=True)
        return t * jax.lax.rsqrt(ms + eps) * g

    B, Sq, dim = x.shape
    Sk = y.shape[1]
    D = dim // num_heads
    q = rmsnorm(linear(x, raw["wq"], raw["bq"]), raw["gq"])
    k = rmsnorm(linear(y, raw["wk"], raw["bk"]), raw["gk"])
    v = linear(y, raw["wv"], raw["bv"])
    qh = q.reshape(B, Sq, num_heads, D).transpose(0, 2, 1, 3)
    kh = k.reshape(B, Sk, num_heads, D).transpose(0, 2, 1, 3)
    vh = v.reshape(B, Sk, num_heads, D).transpose(0, 2, 1, 3)
    s = jnp.einsum("bhqd,bhkd->bhqk", qh, kh) / jnp.sqrt(jnp.float32(D))
    p = jax.nn.softmax(s, axis=-1)
    o = jnp.einsum("bhqk,bhkd->bhqd", p, vh)
    o = o.transpose(0, 2, 1, 3).reshape(B, Sq, dim)
    return linear(o, raw["wo"], raw["bo"])


# --------------------------------- main ---------------------------------------

if __name__ == "__main__":
    B, Sq, Sk = 2, 64, 256
    dim, num_heads = 256, 2          # head_dim = 128 (Wan layout)
    eps = 1e-6

    key = jax.random.PRNGKey(0)
    keys = jax.random.split(key, 12)
    wscale = 1.0 / math.sqrt(dim)

    raw = {
        "wq": jax.random.normal(keys[0], (dim, dim), jnp.float32) * wscale,
        "bq": jax.random.normal(keys[1], (dim,), jnp.float32) * 0.01,
        "wk": jax.random.normal(keys[2], (dim, dim), jnp.float32) * wscale,
        "bk": jax.random.normal(keys[3], (dim,), jnp.float32) * 0.01,
        "wv": jax.random.normal(keys[4], (dim, dim), jnp.float32) * wscale,
        "bv": jax.random.normal(keys[5], (dim,), jnp.float32) * 0.01,
        "wo": jax.random.normal(keys[6], (dim, dim), jnp.float32) * wscale,
        "bo": jax.random.normal(keys[7], (dim,), jnp.float32) * 0.01,
        "gq": jax.random.normal(keys[8], (dim,), jnp.float32) * 0.1 + 1.0,
        "gk": jax.random.normal(keys[9], (dim,), jnp.float32) * 0.1 + 1.0,
    }
    x = jax.random.normal(keys[10], (B, Sq, dim), jnp.float32)
    y = jax.random.normal(keys[11], (B, Sk, dim), jnp.float32)

    params = prepare_params(raw, num_heads, eps)      # one-time, load-time
    ref = _ref_forward(raw, x, y, num_heads, eps)

    # f32 attention operands: tight check of the tiled / online-softmax /
    # fused-KV structure (tkv_target=128 forces a 2-step kv reduction).
    out_f32 = cross_attention_forward(params, x, y,
                                      attn_dtype=jnp.float32, tkv_target=128)
    out_f32 = jax.block_until_ready(out_f32)
    np.testing.assert_allclose(np.asarray(out_f32), np.asarray(ref),
                               rtol=2e-2, atol=2e-2)

    # bf16 MXU operands for the attention matmuls (v6e/v7x production config).
    out_bf16 = cross_attention_forward(params, x, y,
                                       attn_dtype=jnp.bfloat16, tkv_target=128)
    out_bf16 = jax.block_until_ready(out_bf16)
    np.testing.assert_allclose(np.asarray(out_bf16), np.asarray(ref),
                               rtol=3e-2, atol=3e-2)

    print("KERNEL_OK")
</pallas_src>

<mosaic_0001>
module attributes {stable_mosaic.version = 11 : i64} {
  func.func @_linear_rmsnorm_kernel(%arg0: i32, %arg1: i32, %arg2: memref<128x256xf32, #tpu.memory_space<vmem>>, %arg3: memref<256x256xf32, #tpu.memory_space<vmem>>, %arg4: memref<1x256xf32, #tpu.memory_space<vmem>>, %arg5: memref<1x256xf32, #tpu.memory_space<vmem>>, %arg6: memref<128x256xf32, #tpu.memory_space<vmem>>, %arg7: memref<128x256xf32, #tpu.memory_space<vmem>>) attributes {dimension_semantics = [#tpu.dimension_semantics<parallel>, #tpu.dimension_semantics<arbitrary>], iteration_bounds = array<i64: 1, 1>, scalar_prefetch = 0 : i64, scratch_operands = 1 : i64, tpu.core_type = #tpu.core_type<tc>, window_params = [{transform_indices = @transform_0, window_bounds = array<i64: 128, 256>}, {transform_indices = @transform_1, window_bounds = array<i64: 256, 256>}, {pipeline_mode = #tpu.pipeline_mode<synchronous>, transform_indices = @transform_2, window_bounds = array<i64: 1, 256>}, {pipeline_mode = #tpu.pipeline_mode<synchronous>, transform_indices = @transform_3, window_bounds = array<i64: 1, 256>}, {transform_indices = @transform_4, window_bounds = array<i64: 128, 256>}]} {
    %c0_i32 = arith.constant 0 : i32
    %0 = arith.cmpi eq, %arg1, %c0_i32 : i32
    %1 = arith.extui %0 : i1 to i32
    %c0_i32_0 = arith.constant 0 : i32
    %2 = arith.cmpi ne, %1, %c0_i32_0 : i32
    scf.if %2 {
      %cst_10 = arith.constant 0.000000e+00 : f32
      %12 = vector.broadcast %cst_10 : f32 to vector<128x256xf32>
      %c0_11 = arith.constant 0 : index
      %c0_12 = arith.constant 0 : index
      %13 = vector.load %arg7[%c0_11, %c0_12] : memref<128x256xf32, #tpu.memory_space<vmem>>, vector<128x256xf32>
      tpu.vector_store %arg7[%c0_11, %c0_12], %12 {strides = array<i32>} : memref<128x256xf32, #tpu.memory_space<vmem>>, vector<128x256xf32>,
    } else {
    }
    %c0 = arith.constant 0 : index
    %c0_1 = arith.constant 0 : index
    %3 = vector.load %arg7[%c0, %c0_1] : memref<128x256xf32, #tpu.memory_space<vmem>>, vector<128x256xf32>
    %c0_2 = arith.constant 0 : index
    %c0_3 = arith.constant 0 : index
    %4 = vector.load %arg2[%c0_2, %c0_3] : memref<128x256xf32, #tpu.memory_space<vmem>>, vector<128x256xf32>
    %c0_4 = arith.constant 0 : index
    %c0_5 = arith.constant 0 : index
    %5 = vector.load %arg3[%c0_4, %c0_5] : memref<256x256xf32, #tpu.memory_space<vmem>>, vector<256x256xf32>
    %cst = arith.constant dense<0.000000e+00> : vector<128x256xf32>
    %6 = tpu.matmul %4, %5, %cst {dimension_numbers = #tpu.dot_dimension_numbers<[1], [0], [0], [1], [0, 0, 1, 1], [], []>} : vector<128x256xf32>, vector<256x256xf32>, vector<128x256xf32> -> vector<128x256xf32>
    %7 = arith.addf %3, %6 : vector<128x256xf32>
    %c0_6 = arith.constant 0 : index
    %c0_7 = arith.constant 0 : index
    %8 = vector.load %arg7[%c0_6, %c0_7] : memref<128x256xf32, #tpu.memory_space<vmem>>, vector<128x256xf32>
    tpu.vector_store %arg7[%c0_6, %c0_7], %7 {strides = array<i32>} : memref<128x256xf32, #tpu.memory_space<vmem>>, vector<128x256xf32>,
    %c0_i32_8 = arith.constant 0 : i32
    %9 = arith.cmpi eq, %arg1, %c0_i32_8 : i32
    %10 = arith.extui %9 : i1 to i32
    %c0_i32_9 = arith.constant 0 : i32
    %11 = arith.cmpi ne, %10, %c0_i32_9 : i32
    scf.if %11 {
      %c0_10 = arith.constant 0 : index
      %c0_11 = arith.constant 0 : index
      %12 = vector.load %arg7[%c0_10, %c0_11] : memref<128x256xf32, #tpu.memory_space<vmem>>, vector<128x256xf32>
      %c0_12 = arith.constant 0 : index
      %c0_13 = arith.constant 0 : index
      %13 = vector.load %arg4[%c0_12, %c0_13] : memref<1x256xf32, #tpu.memory_space<vmem>>, vector<1x256xf32>
      %14 = vector.broadcast %13 : vector<1x256xf32> to vector<128x256xf32>
      %15 = arith.addf %12, %14 : vector<128x256xf32>
      %16 = arith.mulf %15, %15 : vector<128x256xf32>
      %cst_14 = arith.constant dense<0.000000e+00> : vector<128xf32>
      %17 = vector.multi_reduction <add>, %16, %cst_14 [1] : vector<128x256xf32> to vector<128xf32>
      %18 = vector.shape_cast %17 : vector<128xf32> to vector<128x1xf32>
      %cst_15 = arith.constant 2.560000e+02 : f32
      %19 = vector.broadcast %cst_15 : f32 to vector<128x1xf32>
      %20 = arith.divf %18, %19 : vector<128x1xf32>
      %cst_16 = arith.constant 9.99999997E-7 : f32
      %21 = vector.broadcast %cst_16 : f32 to vector<128x1xf32>
      %22 = arith.addf %20, %21 : vector<128x1xf32>
      %23 = math.rsqrt %22 : vector<128x1xf32>
      %24 = vector.broadcast %23 : vector<128x1xf32> to vector<128x256xf32>
      %25 = arith.mulf %15, %24 : vector<128x256xf32>
      %c0_17 = arith.constant 0 : index
      %c0_18 = arith.constant 0 : index
      %26 = vector.load %arg5[%c0_17, %c0_18] : memref<1x256xf32, #tpu.memory_space<vmem>>, vector<1x256xf32>
      %27 = vector.broadcast %26 : vector<1x256xf32> to vector<128x256xf32>
      %28 = arith.mulf %25, %27 : vector<128x256xf32>
      %c0_19 = arith.constant 0 : index
      %c0_20 = arith.constant 0 : index
      %29 = vector.load %arg6[%c0_19, %c0_20] : memref<128x256xf32, #tpu.memory_space<vmem>>, vector<128x256xf32>
      tpu.vector_store %arg6[%c0_19, %c0_20], %28 {strides = array<i32>} : memref<128x256xf32, #tpu.memory_space<vmem>>, vector<128x256xf32>,
    } else {
    }
    return
  }
  func.func @transform_0(%arg0: i32, %arg1: i32) -> (i32, i32) {
    %c0_i32 = arith.constant 0 : i32
    return %arg0, %arg1 : i32, i32
  }
  func.func @transform_1(%arg0: i32, %arg1: i32) -> (i32, i32) {
    %c0_i32 = arith.constant 0 : i32
    %c0_i32_0 = arith.constant 0 : i32
    return %arg1, %c0_i32 : i32, i32
  }
  func.func @transform_2(%arg0: i32, %arg1: i32) -> (i32, i32) {
    %c0_i32 = arith.constant 0 : i32
    %c0_i32_0 = arith.constant 0 : i32
    %c0_i32_1 = arith.constant 0 : i32
    return %c0_i32, %c0_i32_0 : i32, i32
  }
  func.func @transform_3(%arg0: i32, %arg1: i32) -> (i32, i32) {
    %c0_i32 = arith.constant 0 : i32
    %c0_i32_0 = arith.constant 0 : i32
    %c0_i32_1 = arith.constant 0 : i32
    return %c0_i32, %c0_i32_0 : i32, i32
  }
  func.func @transform_4(%arg0: i32, %arg1: i32) -> (i32, i32) {
    %c0_i32 = arith.constant 0 : i32
    %c0_i32_0 = arith.constant 0 : i32
    return %arg0, %c0_i32 : i32, i32
  }
}

</mosaic_0001>

<llo_original>
// kernel: tpu_custom_call.1
$region0: #{tpu_custom_call.1}
  #allocation0 [shape = 'u32[]', space=smem, size = 0x4, offset = 0x4, fixed_abs, tag = 'smem constant byte address 0x4 - core index']
  #allocation1 [shape = 'u32[72,128]{1,0:T(1,128)}', space=vmem, size = 0x9000, scoped, tag = 'internal scratch']
  #allocation2 [shape = 'f32[128,256]{1,0:T(8,128)}', space=vmem, size = 0x20000, scoped, tag = 'scratch operand']
  %s0 = inlined_call_operand.hbm [shape: f32[128,256], index: 0, kind: input, shape index: {}]
  %s1 = inlined_call_operand.hbm [shape: f32[256,256], index: 1, kind: input, shape index: {}]
  %s2 = inlined_call_operand.hbm [shape: f32[1,256], index: 2, kind: input, shape index: {}]
  %s3 = inlined_call_operand.vmem [shape: f32[1,256], index: 3, kind: input, shape index: {}]
  %s4 = inlined_call_operand.hbm [shape: f32[128,256], index: 4, kind: output, shape index: {}]
  %s5 = sld [smem:[#allocation0]]
  $region46: #{tpu_custom_call.1} parent=0
    _
  %s7 = ssub.s32 1, %s5
  %s8 = scalar_select 0, %s7, %s5
  $region1: #{tpu_custom_call.1} parent=0
    #allocation3 [shape = 'u8[131072]{0}', space=vmem, size = 0x20000, scoped, tag = 'input window, operand 0, single buffered']
    #allocation4 [shape = 's32[1]{0}', space=sflag, size = 0x4, scoped, tag = 'scoped memory for tpu_custom_call.1']
    #allocation5 [shape = 's32[1]{0}', space=sflag, size = 0x4, scoped, tag = 'scoped memory for tpu_custom_call.1']
    #allocation6 [shape = 'u8[262144]{0}', space=vmem, size = 0x40000, scoped, tag = 'input window, operand 1, single buffered']
    #allocation7 [shape = 's32[1]{0}', space=sflag, size = 0x4, scoped, tag = 'scoped memory for tpu_custom_call.1']
    #allocation8 [shape = 'u8[1024]{0}', space=vmem, size = 0x400, scoped, tag = 'input window, operand 2, single buffered']
    #allocation9 [shape = 'u8[131072]{0}', space=vmem, size = 0x20000, scoped, tag = 'output window, operand 0, single buffered']
    %9 = vsyncpa [#allocation4], 0
    %10 = vsyncpa [#allocation7], 0
    %11 = vsyncpa [#allocation5], 0
    // Predicated region
    $region2: #{tpu_custom_call.1} parent=1 // pred_check
      _
    $region3: #{tpu_custom_call.1} parent=1 // pred_check_branch
      %13 = sbr.rel (0) target = $region5
    $region4: #{tpu_custom_call.1} parent=1 // pred_region
      %15 = vsyncadd [#allocation4], 0
      %s16 = sshll.u32 %s0, 4
      %s17 = int_to_ptr.hbm [resolvable:$true] %s16
      %s18 = sshll.u32 [#allocation3], 4
      %s19 = int_to_ptr.vmem [resolvable:$true] %s18
      %24 = dma.hbm_to_vmem [thread:$0]  %s17, 4096, %s19, [#allocation4], 256, 256, 16
    $region5: #{tpu_custom_call.1} parent=1 // pred_fallthru
      _
    // Predicated region
    $region6: #{tpu_custom_call.1} parent=1 // pred_check
      _
    $region7: #{tpu_custom_call.1} parent=1 // pred_check_branch
      %26 = sbr.rel (0) target = $region9
    $region8: #{tpu_custom_call.1} parent=1 // pred_region
      %28 = vsyncadd [#allocation7], 0
      %s29 = sshll.u32 %s1, 4
      %s30 = int_to_ptr.hbm [resolvable:$true] %s29
      %s31 = sshll.u32 [#allocation6], 4
      %s32 = int_to_ptr.vmem [resolvable:$true] %s31
      %37 = dma.hbm_to_vmem [thread:$0]  %s30, 8192, %s32, [#allocation7], 256, 256, 16
    $region9: #{tpu_custom_call.1} parent=1 // pred_fallthru
      _
    // Predicated region
    $region10: #{tpu_custom_call.1} parent=1 // pred_check
      _
    $region11: #{tpu_custom_call.1} parent=1 // pred_check_branch
      %39 = sbr.rel (0) target = $region13
    $region12: #{tpu_custom_call.1} parent=1 // pred_region
      %41 = vsyncadd [#allocation7], 0
      %s43 = sshll.u32 %s2, 4
      %s44 = int_to_ptr.hbm [resolvable:$true] %s43
      %s45 = sshll.u32 [#allocation8], 4
      %s46 = int_to_ptr.vmem [resolvable:$true] %s45
      %48 = dma.hbm_to_vmem [thread:$0]  %s44, 32, %s46, [#allocation7]
    $region13: #{tpu_custom_call.1} parent=1 // pred_fallthru
      _
    // Predicated region
    $region14: #{tpu_custom_call.1} parent=1 // pred_check
      _
    $region15: #{tpu_custom_call.1} parent=1 // pred_check_branch
      %50 = sbr.rel (0) target = $region17
    $region16: #{tpu_custom_call.1} parent=1 // pred_region
      _
    $region17: #{tpu_custom_call.1} parent=1 // pred_fallthru
      _
    // Predicated region
    $region18: #{tpu_custom_call.1} parent=1 // pred_check
      _
    $region19: #{tpu_custom_call.1} parent=1 // pred_check_branch
      %52 = sbr.rel (0) target = $region21
    $region20: #{tpu_custom_call.1} parent=1 // pred_region
      %54 = dma.done [#allocation4], 4096
    $region21: #{tpu_custom_call.1} parent=1 // pred_fallthru
      _
    // Predicated region
    $region22: #{tpu_custom_call.1} parent=1 // pred_check
      _
    $region23: #{tpu_custom_call.1} parent=1 // pred_check_branch
      %56 = sbr.rel (0) target = $region25
    $region24: #{tpu_custom_call.1} parent=1 // pred_region
      %58 = dma.done [#allocation7], 8192
    $region25: #{tpu_custom_call.1} parent=1 // pred_fallthru
      _
    // Predicated region
    $region26: #{tpu_custom_call.1} parent=1 // pred_check
      _
    $region27: #{tpu_custom_call.1} parent=1 // pred_check_branch
      %60 = sbr.rel (0) target = $region29
    $region28: #{tpu_custom_call.1} parent=1 // pred_region
      %62 = dma.done [#allocation7], 32
    $region29: #{tpu_custom_call.1} parent=1 // pred_fallthru
      _
    %p63 = scmp.eq.s32.totalorder 0, 0
    // Predicated region
    $region30: #{tpu_custom_call.1} parent=1 // pred_check
      %p64 = pneg %p63
    $region31: #{tpu_custom_call.1} parent=1 // pred_check_branch
      %66 = sbr.rel (%p64) target = $region33
    $region32: #{tpu_custom_call.1} parent=1 // pred_region
      %67 = vst [vmem:[#allocation2] sm:$0xff] 0.0
      %68 = vst [vmem:[#allocation2 + $0x8] sm:$0xff] 0.0
      %69 = vst [vmem:[#allocation2 + $0x10] sm:$0xff] 0.0
      %70 = vst [vmem:[#allocation2 + $0x18] sm:$0xff] 0.0
      %71 = vst [vmem:[#allocation2 + $0x20] sm:$0xff] 0.0
      %72 = vst [vmem:[#allocation2 + $0x28] sm:$0xff] 0.0
      %73 = vst [vmem:[#allocation2 + $0x30] sm:$0xff] 0.0
      %74 = vst [vmem:[#allocation2 + $0x38] sm:$0xff] 0.0
      %75 = vst [vmem:[#allocation2 + $0x40] sm:$0xff] 0.0
      %76 = vst [vmem:[#allocation2 + $0x48] sm:$0xff] 0.0
      %77 = vst [vmem:[#allocation2 + $0x50] sm:$0xff] 0.0
      %78 = vst [vmem:[#allocation2 + $0x58] sm:$0xff] 0.0
      %79 = vst [vmem:[#allocation2 + $0x60] sm:$0xff] 0.0
      %80 = vst [vmem:[#allocation2 + $0x68] sm:$0xff] 0.0
      %81 = vst [vmem:[#allocation2 + $0x70] sm:$0xff] 0.0
      %82 = vst [vmem:[#allocation2 + $0x78] sm:$0xff] 0.0
      %83 = vst [vmem:[#allocation2 + $0x80] sm:$0xff] 0.0
      %84 = vst [vmem:[#allocation2 + $0x88] sm:$0xff] 0.0
      %85 = vst [vmem:[#allocation2 + $0x90] sm:$0xff] 0.0
      %86 = vst [vmem:[#allocation2 + $0x98] sm:$0xff] 0.0
      %87 = vst [vmem:[#allocation2 + $0xa0] sm:$0xff] 0.0
      %88 = vst [vmem:[#allocation2 + $0xa8] sm:$0xff] 0.0
      %89 = vst [vmem:[#allocation2 + $0xb0] sm:$0xff] 0.0
      %90 = vst [vmem:[#allocation2 + $0xb8] sm:$0xff] 0.0
      %91 = vst [vmem:[#allocation2 + $0xc0] sm:$0xff] 0.0
      %92 = vst [vmem:[#allocation2 + $0xc8] sm:$0xff] 0.0
      %93 = vst [vmem:[#allocation2 + $0xd0] sm:$0xff] 0.0
      %94 = vst [vmem:[#allocation2 + $0xd8] sm:$0xff] 0.0
      %95 = vst [vmem:[#allocation2 + $0xe0] sm:$0xff] 0.0
      %96 = vst [vmem:[#allocation2 + $0xe8] sm:$0xff] 0.0
      %97 = vst [vmem:[#allocation2 + $0xf0] sm:$0xff] 0.0
      %98 = vst [vmem:[#allocation2 + $0xf8] sm:$0xff] 0.0
    $region33: #{tpu_custom_call.1} parent=1 // pred_fallthru
      _
    %v99 = vld [vmem:[#allocation2] sm:$0xff]
    %v100 = vld [vmem:[#allocation2 + $0x8] sm:$0xff]
    %v101 = vld [vmem:[#allocation2 + $0x10] sm:$0xff]
    %v102 = vld [vmem:[#allocation2 + $0x18] sm:$0xff]
    %v103 = vld [vmem:[#allocation2 + $0x20] sm:$0xff]
    %v104 = vld [vmem:[#allocation2 + $0x28] sm:$0xff]
    %v105 = vld [vmem:[#allocation2 + $0x30] sm:$0xff]
    %v106 = vld [vmem:[#allocation2 + $0x38] sm:$0xff]
    %v107 = vld [vmem:[#allocation2 + $0x40] sm:$0xff]
    %v108 = vld [vmem:[#allocation2 + $0x48] sm:$0xff]
    %v109 = vld [vmem:[#allocation2 + $0x50] sm:$0xff]
    %v110 = vld [vmem:[#allocation2 + $0x58] sm:$0xff]
    %v111 = vld [vmem:[#allocation2 + $0x60] sm:$0xff]
    %v112 = vld [vmem:[#allocation2 + $0x68] sm:$0xff]
    %v113 = vld [vmem:[#allocation2 + $0x70] sm:$0xff]
    %v114 = vld [vmem:[#allocation2 + $0x78] sm:$0xff]
    %v115 = vld [vmem:[#allocation2 + $0x80] sm:$0xff]
    %v116 = vld [vmem:[#allocation2 + $0x88] sm:$0xff]
    %v117 = vld [vmem:[#allocation2 + $0x90] sm:$0xff]
    %v118 = vld [vmem:[#allocation2 + $0x98] sm:$0xff]
    %v119 = vld [vmem:[#allocation2 + $0xa0] sm:$0xff]
    %v120 = vld [vmem:[#allocation2 + $0xa8] sm:$0xff]
    %v121 = vld [vmem:[#allocation2 + $0xb0] sm:$0xff]
    %v122 = vld [vmem:[#allocation2 + $0xb8] sm:$0xff]
    %v123 = vld [vmem:[#allocation2 + $0xc0] sm:$0xff]
    %v124 = vld [vmem:[#allocation2 + $0xc8] sm:$0xff]
    %v125 = vld [vmem:[#allocation2 + $0xd0] sm:$0xff]
    %v126 = vld [vmem:[#allocation2 + $0xd8] sm:$0xff]
    %v127 = vld [vmem:[#allocation2 + $0xe0] sm:$0xff]
    %v128 = vld [vmem:[#allocation2 + $0xe8] sm:$0xff]
    %v129 = vld [vmem:[#allocation2 + $0xf0] sm:$0xff]
    %v130 = vld [vmem:[#allocation2 + $0xf8] sm:$0xff]
    %v131 = vld [vmem:[#allocation3] sm:$0xff]
    %v132 = vld [vmem:[#allocation3 + $0x8] sm:$0xff]
    %v133 = vld [vmem:[#allocation3 + $0x10] sm:$0xff]
    %v134 = vld [vmem:[#allocation3 + $0x18] sm:$0xff]
    %v135 = vld [vmem:[#allocation3 + $0x20] sm:$0xff]
    %v136 = vld [vmem:[#allocation3 + $0x28] sm:$0xff]
    %v137 = vld [vmem:[#allocation3 + $0x30] sm:$0xff]
    %v138 = vld [vmem:[#allocation3 + $0x38] sm:$0xff]
    %v139 = vld [vmem:[#allocation3 + $0x40] sm:$0xff]
    %v140 = vld [vmem:[#allocation3 + $0x48] sm:$0xff]
    %v141 = vld [vmem:[#allocation3 + $0x50] sm:$0xff]
    %v142 = vld [vmem:[#allocation3 + $0x58] sm:$0xff]
    %v143 = vld [vmem:[#allocation3 + $0x60] sm:$0xff]
    %v144 = vld [vmem:[#allocation3 + $0x68] sm:$0xff]
    %v145 = vld [vmem:[#allocation3 + $0x70] sm:$0xff]
    %v146 = vld [vmem:[#allocation3 + $0x78] sm:$0xff]
    %v147 = vld [vmem:[#allocation3 + $0x80] sm:$0xff]
    %v148 = vld [vmem:[#allocation3 + $0x88] sm:$0xff]
    %v149 = vld [vmem:[#allocation3 + $0x90] sm:$0xff]
    %v150 = vld [vmem:[#allocation3 + $0x98] sm:$0xff]
    %v151 = vld [vmem:[#allocation3 + $0xa0] sm:$0xff]
    %v152 = vld [vmem:[#allocation3 + $0xa8] sm:$0xff]
    %v153 = vld [vmem:[#allocation3 + $0xb0] sm:$0xff]
    %v154 = vld [vmem:[#allocation3 + $0xb8] sm:$0xff]
    %v155 = vld [vmem:[#allocation3 + $0xc0] sm:$0xff]
    %v156 = vld [vmem:[#allocation3 + $0xc8] sm:$0xff]
    %v157 = vld [vmem:[#allocation3 + $0xd0] sm:$0xff]
    %v158 = vld [vmem:[#allocation3 + $0xd8] sm:$0xff]
    %v159 = vld [vmem:[#allocation3 + $0xe0] sm:$0xff]
    %v160 = vld [vmem:[#allocation3 + $0xe8] sm:$0xff]
    %v161 = vld [vmem:[#allocation3 + $0xf0] sm:$0xff]
    %v162 = vld [vmem:[#allocation3 + $0xf8] sm:$0xff]
    %v163 = vld [vmem:[#allocation6] sm:$0xff]
    %v164 = vld [vmem:[#allocation6 + $0x8] sm:$0xff]
    %v165 = vld [vmem:[#allocation6 + $0x10] sm:$0xff]
    %v166 = vld [vmem:[#allocation6 + $0x18] sm:$0xff]
    %v167 = vld [vmem:[#allocation6 + $0x20] sm:$0xff]
    %v168 = vld [vmem:[#allocation6 + $0x28] sm:$0xff]
    %v169 = vld [vmem:[#allocation6 + $0x30] sm:$0xff]
    %v170 = vld [vmem:[#allocation6 + $0x38] sm:$0xff]
    %v171 = vld [vmem:[#allocation6 + $0x40] sm:$0xff]
    %v172 = vld [vmem:[#allocation6 + $0x48] sm:$0xff]
    %v173 = vld [vmem:[#allocation6 + $0x50] sm:$0xff]
    %v174 = vld [vmem:[#allocation6 + $0x58] sm:$0xff]
    %v175 = vld [vmem:[#allocation6 + $0x60] sm:$0xff]
    %v176 = vld [vmem:[#allocation6 + $0x68] sm:$0xff]
    %v177 = vld [vmem:[#allocation6 + $0x70] sm:$0xff]
    %v178 = vld [vmem:[#allocation6 + $0x78] sm:$0xff]
    %v179 = vld [vmem:[#allocation6 + $0x80] sm:$0xff]
    %v180 = vld [vmem:[#allocation6 + $0x88] sm:$0xff]
    %v181 = vld [vmem:[#allocation6 + $0x90] sm:$0xff]
    %v182 = vld [vmem:[#allocation6 + $0x98] sm:$0xff]
    %v183 = vld [vmem:[#allocation6 + $0xa0] sm:$0xff]
    %v184 = vld [vmem:[#allocation6 + $0xa8] sm:$0xff]
    %v185 = vld [vmem:[#allocation6 + $0xb0] sm:$0xff]
    %v186 = vld [vmem:[#allocation6 + $0xb8] sm:$0xff]
    %v187 = vld [vmem:[#allocation6 + $0xc0] sm:$0xff]
    %v188 = vld [vmem:[#allocation6 + $0xc8] sm:$0xff]
    %v189 = vld [vmem:[#allocation6 + $0xd0] sm:$0xff]
    %v190 = vld [vmem:[#allocation6 + $0xd8] sm:$0xff]
    %v191 = vld [vmem:[#allocation6 + $0xe0] sm:$0xff]
    %v192 = vld [vmem:[#allocation6 + $0xe8] sm:$0xff]
    %v193 = vld [vmem:[#allocation6 + $0xf0] sm:$0xff]
    %v194 = vld [vmem:[#allocation6 + $0xf8] sm:$0xff]
    %v195 = vld [vmem:[#allocation6 + $0x100] sm:$0xff]
    %v196 = vld [vmem:[#allocation6 + $0x108] sm:$0xff]
    %v197 = vld [vmem:[#allocation6 + $0x110] sm:$0xff]
    %v198 = vld [vmem:[#allocation6 + $0x118] sm:$0xff]
    %v199 = vld [vmem:[#allocation6 + $0x120] sm:$0xff]
    %v200 = vld [vmem:[#allocation6 + $0x128] sm:$0xff]
    %v201 = vld [vmem:[#allocation6 + $0x130] sm:$0xff]
    %v202 = vld [vmem:[#allocation6 + $0x138] sm:$0xff]
    %v203 = vld [vmem:[#allocation6 + $0x140] sm:$0xff]
    %v204 = vld [vmem:[#allocation6 + $0x148] sm:$0xff]
    %v205 = vld [vmem:[#allocation6 + $0x150] sm:$0xff]
    %v206 = vld [vmem:[#allocation6 + $0x158] sm:$0xff]
    %v207 = vld [vmem:[#allocation6 + $0x160] sm:$0xff]
    %v208 = vld [vmem:[#allocation6 + $0x168] sm:$0xff]
    %v209 = vld [vmem:[#allocation6 + $0x170] sm:$0xff]
    %v210 = vld [vmem:[#allocation6 + $0x178] sm:$0xff]
    %v211 = vld [vmem:[#allocation6 + $0x180] sm:$0xff]
    %v212 = vld [vmem:[#allocation6 + $0x188] sm:$0xff]
    %v213 = vld [vmem:[#allocation6 + $0x190] sm:$0xff]
    %v214 = vld [vmem:[#allocation6 + $0x198] sm:$0xff]
    %v215 = vld [vmem:[#allocation6 + $0x1a0] sm:$0xff]
    %v216 = vld [vmem:[#allocation6 + $0x1a8] sm:$0xff]
    %v217 = vld [vmem:[#allocation6 + $0x1b0] sm:$0xff]
    %v218 = vld [vmem:[#allocation6 + $0x1b8] sm:$0xff]
    %v219 = vld [vmem:[#allocation6 + $0x1c0] sm:$0xff]
    %v220 = vld [vmem:[#allocation6 + $0x1c8] sm:$0xff]
    %v221 = vld [vmem:[#allocation6 + $0x1d0] sm:$0xff]
    %v222 = vld [vmem:[#allocation6 + $0x1d8] sm:$0xff]
    %v223 = vld [vmem:[#allocation6 + $0x1e0] sm:$0xff]
    %v224 = vld [vmem:[#allocation6 + $0x1e8] sm:$0xff]
    %v225 = vld [vmem:[#allocation6 + $0x1f0] sm:$0xff]
    %v226 = vld [vmem:[#allocation6 + $0x1f8] sm:$0xff]
    %227 = vmatpush.msra.mxu0 %v193
    %228 = vmatpush.msra.mxu0 %v191
    %229 = vmatpush.msra.mxu0 %v189
    %230 = vmatpush.msra.mxu0 %v187
    %231 = vmatpush.msra.mxu0 %v185
    %232 = vmatpush.msra.mxu0 %v183
    %233 = vmatpush.msra.mxu0 %v181
    %234 = vmatpush.msra.mxu0 %v179
    %235 = vmatpush.msra.mxu0 %v177
    %236 = vmatpush.msra.mxu0 %v175
    %237 = vmatpush.msra.mxu0 %v173
    %238 = vmatpush.msra.mxu0 %v171
    %239 = vmatpush.msra.mxu0 %v169
    %240 = vmatpush.msra.mxu0 %v167
    %241 = vmatpush.msra.mxu0 %v165
    %242 = vmatpush.msra.mxu0 %v163
    %243 = vmatmul.f32.gmra.mxu0 %v131
    %v244 = vpop.f32.mrf.mxu0
    %v245 = vadd.f32 0.0, %v244
    %246 = vmatmul.f32.gmra.mxu0 %v133
    %v247 = vpop.f32.mrf.mxu0
    %v248 = vadd.f32 0.0, %v247
    %249 = vmatmul.f32.gmra.mxu0 %v135
    %v250 = vpop.f32.mrf.mxu0
    %v251 = vadd.f32 0.0, %v250
    %252 = vmatmul.f32.gmra.mxu0 %v137
    %v253 = vpop.f32.mrf.mxu0
    %v254 = vadd.f32 0.0, %v253
    %255 = vmatmul.f32.gmra.mxu0 %v139
    %v256 = vpop.f32.mrf.mxu0
    %v257 = vadd.f32 0.0, %v256
    %258 = vmatmul.f32.gmra.mxu0 %v141
    %v259 = vpop.f32.mrf.mxu0
    %v260 = vadd.f32 0.0, %v259
    %261 = vmatmul.f32.gmra.mxu0 %v143
    %v262 = vpop.f32.mrf.mxu0
    %v263 = vadd.f32 0.0, %v262
    %264 = vmatmul.f32.gmra.mxu0 %v145
    %v265 = vpop.f32.mrf.mxu0
    %v266 = vadd.f32 0.0, %v265
    %267 = vmatmul.f32.gmra.mxu0 %v147
    %v268 = vpop.f32.mrf.mxu0
    %v269 = vadd.f32 0.0, %v268
    %270 = vmatmul.f32.gmra.mxu0 %v149
    %v271 = vpop.f32.mrf.mxu0
    %v272 = vadd.f32 0.0, %v271
    %273 = vmatmul.f32.gmra.mxu0 %v151
    %v274 = vpop.f32.mrf.mxu0
    %v275 = vadd.f32 0.0, %v274
    %276 = vmatmul.f32.gmra.mxu0 %v153
    %v277 = vpop.f32.mrf.mxu0
    %v278 = vadd.f32 0.0, %v277
    %279 = vmatmul.f32.gmra.mxu0 %v155
    %v280 = vpop.f32.mrf.mxu0
    %v281 = vadd.f32 0.0, %v280
    %282 = vmatmul.f32.gmra.mxu0 %v157
    %v283 = vpop.f32.mrf.mxu0
    %v284 = vadd.f32 0.0, %v283
    %285 = vmatmul.f32.gmra.mxu0 %v159
    %v286 = vpop.f32.mrf.mxu0
    %v287 = vadd.f32 0.0, %v286
    %288 = vmatmul.f32.gmra.mxu0 %v161
    %v289 = vpop.f32.mrf.mxu0
    %v290 = vadd.f32 0.0, %v289
    %291 = vdwg.mxu0
    %292 = vmatpush.msra.mxu0 %v225
    %293 = vmatpush.msra.mxu0 %v223
    %294 = vmatpush.msra.mxu0 %v221
    %295 = vmatpush.msra.mxu0 %v219
    %296 = vmatpush.msra.mxu0 %v217
    %297 = vmatpush.msra.mxu0 %v215
    %298 = vmatpush.msra.mxu0 %v213
    %299 = vmatpush.msra.mxu0 %v211
    %300 = vmatpush.msra.mxu0 %v209
    %301 = vmatpush.msra.mxu0 %v207
    %302 = vmatpush.msra.mxu0 %v205
    %303 = vmatpush.msra.mxu0 %v203
    %304 = vmatpush.msra.mxu0 %v201
    %305 = vmatpush.msra.mxu0 %v199
    %306 = vmatpush.msra.mxu0 %v197
    %307 = vmatpush.msra.mxu0 %v195
    %308 = vmatmul.f32.gmra.mxu0 %v132
    %v309 = vpop.f32.mrf.mxu0
    %v310 = vadd.f32 %v245, %v309
    %311 = vmatmul.f32.gmra.mxu0 %v134
    %v312 = vpop.f32.mrf.mxu0
    %v313 = vadd.f32 %v248, %v312
    %314 = vmatmul.f32.gmra.mxu0 %v136
    %v315 = vpop.f32.mrf.mxu0
    %v316 = vadd.f32 %v251, %v315
    %317 = vmatmul.f32.gmra.mxu0 %v138
    %v318 = vpop.f32.mrf.mxu0
    %v319 = vadd.f32 %v254, %v318
    %320 = vmatmul.f32.gmra.mxu0 %v140
    %v321 = vpop.f32.mrf.mxu0
    %v322 = vadd.f32 %v257, %v321
    %323 = vmatmul.f32.gmra.mxu0 %v142
    %v324 = vpop.f32.mrf.mxu0
    %v325 = vadd.f32 %v260, %v324
    %326 = vmatmul.f32.gmra.mxu0 %v144
    %v327 = vpop.f32.mrf.mxu0
    %v328 = vadd.f32 %v263, %v327
    %329 = vmatmul.f32.gmra.mxu0 %v146
    %v330 = vpop.f32.mrf.mxu0
    %v331 = vadd.f32 %v266, %v330
    %332 = vmatmul.f32.gmra.mxu0 %v148
    %v333 = vpop.f32.mrf.mxu0
    %v334 = vadd.f32 %v269, %v333
    %335 = vmatmul.f32.gmra.mxu0 %v150
    %v336 = vpop.f32.mrf.mxu0
    %v337 = vadd.f32 %v272, %v336
    %338 = vmatmul.f32.gmra.mxu0 %v152
    %v339 = vpop.f32.mrf.mxu0
    %v340 = vadd.f32 %v275, %v339
    %341 = vmatmul.f32.gmra.mxu0 %v154
    %v342 = vpop.f32.mrf.mxu0
    %v343 = vadd.f32 %v278, %v342
    %344 = vmatmul.f32.gmra.mxu0 %v156
    %v345 = vpop.f32.mrf.mxu0
    %v346 = vadd.f32 %v281, %v345
    %347 = vmatmul.f32.gmra.mxu0 %v158
    %v348 = vpop.f32.mrf.mxu0
    %v349 = vadd.f32 %v284, %v348
    %350 = vmatmul.f32.gmra.mxu0 %v160
    %v351 = vpop.f32.mrf.mxu0
    %v352 = vadd.f32 %v287, %v351
    %353 = vmatmul.f32.gmra.mxu0 %v162
    %v354 = vpop.f32.mrf.mxu0
    %v355 = vadd.f32 %v290, %v354
    %356 = vdwg.mxu0
    %357 = vmatpush.msra.mxu0 %v194
    %358 = vmatpush.msra.mxu0 %v192
    %359 = vmatpush.msra.mxu0 %v190
    %360 = vmatpush.msra.mxu0 %v188
    %361 = vmatpush.msra.mxu0 %v186
    %362 = vmatpush.msra.mxu0 %v184
    %363 = vmatpush.msra.mxu0 %v182
    %364 = vmatpush.msra.mxu0 %v180
    %365 = vmatpush.msra.mxu0 %v178
    %366 = vmatpush.msra.mxu0 %v176
    %367 = vmatpush.msra.mxu0 %v174
    %368 = vmatpush.msra.mxu0 %v172
    %369 = vmatpush.msra.mxu0 %v170
    %370 = vmatpush.msra.mxu0 %v168
    %371 = vmatpush.msra.mxu0 %v166
    %372 = vmatpush.msra.mxu0 %v164
    %373 = vmatmul.f32.gmra.mxu0 %v131
    %v374 = vpop.f32.mrf.mxu0
    %v375 = vadd.f32 0.0, %v374
    %376 = vmatmul.f32.gmra.mxu0 %v133
    %v377 = vpop.f32.mrf.mxu0
    %v378 = vadd.f32 0.0, %v377
    %379 = vmatmul.f32.gmra.mxu0 %v135
    %v380 = vpop.f32.mrf.mxu0
    %v381 = vadd.f32 0.0, %v380
    %382 = vmatmul.f32.gmra.mxu0 %v137
    %v383 = vpop.f32.mrf.mxu0
    %v384 = vadd.f32 0.0, %v383
    %385 = vmatmul.f32.gmra.mxu0 %v139
    %v386 = vpop.f32.mrf.mxu0
    %v387 = vadd.f32 0.0, %v386
    %388 = vmatmul.f32.gmra.mxu0 %v141
    %v389 = vpop.f32.mrf.mxu0
    %v390 = vadd.f32 0.0, %v389
    %391 = vmatmul.f32.gmra.mxu0 %v143
    %v392 = vpop.f32.mrf.mxu0
    %v393 = vadd.f32 0.0, %v392
    %394 = vmatmul.f32.gmra.mxu0 %v145
    %v395 = vpop.f32.mrf.mxu0
    %v396 = vadd.f32 0.0, %v395
    %397 = vmatmul.f32.gmra.mxu0 %v147
    %v398 = vpop.f32.mrf.mxu0
    %v399 = vadd.f32 0.0, %v398
    %400 = vmatmul.f32.gmra.mxu0 %v149
    %v401 = vpop.f32.mrf.mxu0
    %v402 = vadd.f32 0.0, %v401
    %403 = vmatmul.f32.gmra.mxu0 %v151
    %v404 = vpop.f32.mrf.mxu0
    %v405 = vadd.f32 0.0, %v404
    %406 = vmatmul.f32.gmra.mxu0 %v153
    %v407 = vpop.f32.mrf.mxu0
    %v408 = vadd.f32 0.0, %v407
    %409 = vmatmul.f32.gmra.mxu0 %v155
    %v410 = vpop.f32.mrf.mxu0
    %v411 = vadd.f32 0.0, %v410
    %412 = vmatmul.f32.gmra.mxu0 %v157
    %v413 = vpop.f32.mrf.mxu0
    %v414 = vadd.f32 0.0, %v413
    %415 = vmatmul.f32.gmra.mxu0 %v159
    %v416 = vpop.f32.mrf.mxu0
    %v417 = vadd.f32 0.0, %v416
    %418 = vmatmul.f32.gmra.mxu0 %v161
    %v419 = vpop.f32.mrf.mxu0
    %v420 = vadd.f32 0.0, %v419
    %421 = vdwg.mxu0
    %422 = vmatpush.msra.mxu0 %v226
    %423 = vmatpush.msra.mxu0 %v224
    %424 = vmatpush.msra.mxu0 %v222
    %425 = vmatpush.msra.mxu0 %v220
    %426 = vmatpush.msra.mxu0 %v218
    %427 = vmatpush.msra.mxu0 %v216
    %428 = vmatpush.msra.mxu0 %v214
    %429 = vmatpush.msra.mxu0 %v212
    %430 = vmatpush.msra.mxu0 %v210
    %431 = vmatpush.msra.mxu0 %v208
    %432 = vmatpush.msra.mxu0 %v206
    %433 = vmatpush.msra.mxu0 %v204
    %434 = vmatpush.msra.mxu0 %v202
    %435 = vmatpush.msra.mxu0 %v200
    %436 = vmatpush.msra.mxu0 %v198
    %437 = vmatpush.msra.mxu0 %v196
    %438 = vmatmul.f32.gmra.mxu0 %v132
    %v439 = vpop.f32.mrf.mxu0
    %v440 = vadd.f32 %v375, %v439
    %441 = vmatmul.f32.gmra.mxu0 %v134
    %v442 = vpop.f32.mrf.mxu0
    %v443 = vadd.f32 %v378, %v442
    %444 = vmatmul.f32.gmra.mxu0 %v136
    %v445 = vpop.f32.mrf.mxu0
    %v446 = vadd.f32 %v381, %v445
    %447 = vmatmul.f32.gmra.mxu0 %v138
    %v448 = vpop.f32.mrf.mxu0
    %v449 = vadd.f32 %v384, %v448
    %450 = vmatmul.f32.gmra.mxu0 %v140
    %v451 = vpop.f32.mrf.mxu0
    %v452 = vadd.f32 %v387, %v451
    %453 = vmatmul.f32.gmra.mxu0 %v142
    %v454 = vpop.f32.mrf.mxu0
    %v455 = vadd.f32 %v390, %v454
    %456 = vmatmul.f32.gmra.mxu0 %v144
    %v457 = vpop.f32.mrf.mxu0
    %v458 = vadd.f32 %v393, %v457
    %459 = vmatmul.f32.gmra.mxu0 %v146
    %v460 = vpop.f32.mrf.mxu0
    %v461 = vadd.f32 %v396, %v460
    %462 = vmatmul.f32.gmra.mxu0 %v148
    %v463 = vpop.f32.mrf.mxu0
    %v464 = vadd.f32 %v399, %v463
    %465 = vmatmul.f32.gmra.mxu0 %v150
    %v466 = vpop.f32.mrf.mxu0
    %v467 = vadd.f32 %v402, %v466
    %468 = vmatmul.f32.gmra.mxu0 %v152
    %v469 = vpop.f32.mrf.mxu0
    %v470 = vadd.f32 %v405, %v469
    %471 = vmatmul.f32.gmra.mxu0 %v154
    %v472 = vpop.f32.mrf.mxu0
    %v473 = vadd.f32 %v408, %v472
    %474 = vmatmul.f32.gmra.mxu0 %v156
    %v475 = vpop.f32.mrf.mxu0
    %v476 = vadd.f32 %v411, %v475
    %477 = vmatmul.f32.gmra.mxu0 %v158
    %v478 = vpop.f32.mrf.mxu0
    %v479 = vadd.f32 %v414, %v478
    %480 = vmatmul.f32.gmra.mxu0 %v160
    %v481 = vpop.f32.mrf.mxu0
    %v482 = vadd.f32 %v417, %v481
    %483 = vmatmul.f32.gmra.mxu0 %v162
    %v484 = vpop.f32.mrf.mxu0
    %v485 = vadd.f32 %v420, %v484
    %486 = vdwg.mxu0
    %v487 = vadd.f32 %v99, %v310
    %v488 = vadd.f32 %v100, %v440
    %v489 = vadd.f32 %v101, %v313
    %v490 = vadd.f32 %v102, %v443
    %v491 = vadd.f32 %v103, %v316
    %v492 = vadd.f32 %v104, %v446
    %v493 = vadd.f32 %v105, %v319
    %v494 = vadd.f32 %v106, %v449
    %v495 = vadd.f32 %v107, %v322
    %v496 = vadd.f32 %v108, %v452
    %v497 = vadd.f32 %v109, %v325
    %v498 = vadd.f32 %v110, %v455
    %v499 = vadd.f32 %v111, %v328
    %v500 = vadd.f32 %v112, %v458
    %v501 = vadd.f32 %v113, %v331
    %v502 = vadd.f32 %v114, %v461
    %v503 = vadd.f32 %v115, %v334
    %v504 = vadd.f32 %v116, %v464
    %v505 = vadd.f32 %v117, %v337
    %v506 = vadd.f32 %v118, %v467
    %v507 = vadd.f32 %v119, %v340
    %v508 = vadd.f32 %v120, %v470
    %v509 = vadd.f32 %v121, %v343
    %v510 = vadd.f32 %v122, %v473
    %v511 = vadd.f32 %v123, %v346
    %v512 = vadd.f32 %v124, %v476
    %v513 = vadd.f32 %v125, %v349
    %v514 = vadd.f32 %v126, %v479
    %v515 = vadd.f32 %v127, %v352
    %v516 = vadd.f32 %v128, %v482
    %v517 = vadd.f32 %v129, %v355
    %v518 = vadd.f32 %v130, %v485
    %519 = vst [vmem:[#allocation2] sm:$0xff] %v487
    %520 = vst [vmem:[#allocation2 + $0x8] sm:$0xff] %v488
    %521 = vst [vmem:[#allocation2 + $0x10] sm:$0xff] %v489
    %522 = vst [vmem:[#allocation2 + $0x18] sm:$0xff] %v490
    %523 = vst [vmem:[#allocation2 + $0x20] sm:$0xff] %v491
    %524 = vst [vmem:[#allocation2 + $0x28] sm:$0xff] %v492
    %525 = vst [vmem:[#allocation2 + $0x30] sm:$0xff] %v493
    %526 = vst [vmem:[#allocation2 + $0x38] sm:$0xff] %v494
    %527 = vst [vmem:[#allocation2 + $0x40] sm:$0xff] %v495
    %528 = vst [vmem:[#allocation2 + $0x48] sm:$0xff] %v496
    %529 = vst [vmem:[#allocation2 + $0x50] sm:$0xff] %v497
    %530 = vst [vmem:[#allocation2 + $0x58] sm:$0xff] %v498
    %531 = vst [vmem:[#allocation2 + $0x60] sm:$0xff] %v499
    %532 = vst [vmem:[#allocation2 + $0x68] sm:$0xff] %v500
    %533 = vst [vmem:[#allocation2 + $0x70] sm:$0xff] %v501
    %534 = vst [vmem:[#allocation2 + $0x78] sm:$0xff] %v502
    %535 = vst [vmem:[#allocation2 + $0x80] sm:$0xff] %v503
    %536 = vst [vmem:[#allocation2 + $0x88] sm:$0xff] %v504
    %537 = vst [vmem:[#allocation2 + $0x90] sm:$0xff] %v505
    %538 = vst [vmem:[#allocation2 + $0x98] sm:$0xff] %v506
    %539 = vst [vmem:[#allocation2 + $0xa0] sm:$0xff] %v507
    %540 = vst [vmem:[#allocation2 + $0xa8] sm:$0xff] %v508
    %541 = vst [vmem:[#allocation2 + $0xb0] sm:$0xff] %v509
    %542 = vst [vmem:[#allocation2 + $0xb8] sm:$0xff] %v510
    %543 = vst [vmem:[#allocation2 + $0xc0] sm:$0xff] %v511
    %544 = vst [vmem:[#allocation2 + $0xc8] sm:$0xff] %v512
    %545 = vst [vmem:[#allocation2 + $0xd0] sm:$0xff] %v513
    %546 = vst [vmem:[#allocation2 + $0xd8] sm:$0xff] %v514
    %547 = vst [vmem:[#allocation2 + $0xe0] sm:$0xff] %v515
    %548 = vst [vmem:[#allocation2 + $0xe8] sm:$0xff] %v516
    %549 = vst [vmem:[#allocation2 + $0xf0] sm:$0xff] %v517
    %550 = vst [vmem:[#allocation2 + $0xf8] sm:$0xff] %v518
    // Predicated region
    $region34: #{tpu_custom_call.1} parent=1 // pred_check
      %p551 = pneg %p63
    $region35: #{tpu_custom_call.1} parent=1 // pred_check_branch
      %553 = sbr.rel (%p551) target = $region37
    $region36: #{tpu_custom_call.1} parent=1 // pred_region
      %v554 = vld [vmem:[#allocation2] sm:$0xff]
      %v555 = vld [vmem:[#allocation2 + $0x8] sm:$0xff]
      %v556 = vld [vmem:[#allocation2 + $0x10] sm:$0xff]
      %v557 = vld [vmem:[#allocation2 + $0x18] sm:$0xff]
      %v558 = vld [vmem:[#allocation2 + $0x20] sm:$0xff]
      %v559 = vld [vmem:[#allocation2 + $0x28] sm:$0xff]
      %v560 = vld [vmem:[#allocation2 + $0x30] sm:$0xff]
      %v561 = vld [vmem:[#allocation2 + $0x38] sm:$0xff]
      %v562 = vld [vmem:[#allocation2 + $0x40] sm:$0xff]
      %v563 = vld [vmem:[#allocation2 + $0x48] sm:$0xff]
      %v564 = vld [vmem:[#allocation2 + $0x50] sm:$0xff]
      %v565 = vld [vmem:[#allocation2 + $0x58] sm:$0xff]
      %v566 = vld [vmem:[#allocation2 + $0x60] sm:$0xff]
      %v567 = vld [vmem:[#allocation2 + $0x68] sm:$0xff]
      %v568 = vld [vmem:[#allocation2 + $0x70] sm:$0xff]
      %v569 = vld [vmem:[#allocation2 + $0x78] sm:$0xff]
      %v570 = vld [vmem:[#allocation2 + $0x80] sm:$0xff]
      %v571 = vld [vmem:[#allocation2 + $0x88] sm:$0xff]
      %v572 = vld [vmem:[#allocation2 + $0x90] sm:$0xff]
      %v573 = vld [vmem:[#allocation2 + $0x98] sm:$0xff]
      %v574 = vld [vmem:[#allocation2 + $0xa0] sm:$0xff]
      %v575 = vld [vmem:[#allocation2 + $0xa8] sm:$0xff]
      %v576 = vld [vmem:[#allocation2 + $0xb0] sm:$0xff]
      %v577 = vld [vmem:[#allocation2 + $0xb8] sm:$0xff]
      %v578 = vld [vmem:[#allocation2 + $0xc0] sm:$0xff]
      %v579 = vld [vmem:[#allocation2 + $0xc8] sm:$0xff]
      %v580 = vld [vmem:[#allocation2 + $0xd0] sm:$0xff]
      %v581 = vld [vmem:[#allocation2 + $0xd8] sm:$0xff]
      %v582 = vld [vmem:[#allocation2 + $0xe0] sm:$0xff]
      %v583 = vld [vmem:[#allocation2 + $0xe8] sm:$0xff]
      %v584 = vld [vmem:[#allocation2 + $0xf0] sm:$0xff]
      %v585 = vld [vmem:[#allocation2 + $0xf8] sm:$0xff]
      %v586 = vld [vmem:[#allocation8] sm:$0x3]
      %v588 = vperm.slane %v586, 0
      %v589 = vperm.slane %v586, 1
      %v592 = vadd.f32 %v554, %v588
      %v593 = vadd.f32 %v555, %v589
      %v594 = vadd.f32 %v556, %v588
      %v595 = vadd.f32 %v557, %v589
      %v596 = vadd.f32 %v558, %v588
      %v597 = vadd.f32 %v559, %v589
      %v598 = vadd.f32 %v560, %v588
      %v599 = vadd.f32 %v561, %v589
      %v600 = vadd.f32 %v562, %v588
      %v601 = vadd.f32 %v563, %v589
      %v602 = vadd.f32 %v564, %v588
      %v603 = vadd.f32 %v565, %v589
      %v604 = vadd.f32 %v566, %v588
      %v605 = vadd.f32 %v567, %v589
      %v606 = vadd.f32 %v568, %v588
      %v607 = vadd.f32 %v569, %v589
      %v608 = vadd.f32 %v570, %v588
      %v609 = vadd.f32 %v571, %v589
      %v610 = vadd.f32 %v572, %v588
      %v611 = vadd.f32 %v573, %v589
      %v612 = vadd.f32 %v574, %v588
      %v613 = vadd.f32 %v575, %v589
      %v614 = vadd.f32 %v576, %v588
      %v615 = vadd.f32 %v577, %v589
      %v616 = vadd.f32 %v578, %v588
      %v617 = vadd.f32 %v579, %v589
      %v618 = vadd.f32 %v580, %v588
      %v619 = vadd.f32 %v581, %v589
      %v620 = vadd.f32 %v582, %v588
      %v621 = vadd.f32 %v583, %v589
      %v622 = vadd.f32 %v584, %v588
      %v623 = vadd.f32 %v585, %v589
      %v624 = vmul.f32 %v592, %v592
      %v625 = vmul.f32 %v593, %v593
      %v626 = vmul.f32 %v594, %v594
      %v627 = vmul.f32 %v595, %v595
      %v628 = vmul.f32 %v596, %v596
      %v629 = vmul.f32 %v597, %v597
      %v630 = vmul.f32 %v598, %v598
      %v631 = vmul.f32 %v599, %v599
      %v632 = vmul.f32 %v600, %v600
      %v633 = vmul.f32 %v601, %v601
      %v634 = vmul.f32 %v602, %v602
      %v635 = vmul.f32 %v603, %v603
      %v636 = vmul.f32 %v604, %v604
      %v637 = vmul.f32 %v605, %v605
      %v638 = vmul.f32 %v606, %v606
      %v639 = vmul.f32 %v607, %v607
      %v640 = vmul.f32 %v608, %v608
      %v641 = vmul.f32 %v609, %v609
      %v642 = vmul.f32 %v610, %v610
      %v643 = vmul.f32 %v611, %v611
      %v644 = vmul.f32 %v612, %v612
      %v645 = vmul.f32 %v613, %v613
      %v646 = vmul.f32 %v614, %v614
      %v647 = vmul.f32 %v615, %v615
      %v648 = vmul.f32 %v616, %v616
      %v649 = vmul.f32 %v617, %v617
      %v650 = vmul.f32 %v618, %v618
      %v651 = vmul.f32 %v619, %v619
      %v652 = vmul.f32 %v620, %v620
      %v653 = vmul.f32 %v621, %v621
      %v654 = vmul.f32 %v622, %v622
      %v655 = vmul.f32 %v623, %v623
      %v656 = vadd.f32 %v624, %v625
      %657 = vadd.xlane.f32.xlu0 %v656
      %v658 = vpop.xlane.xlu0 %657
      %v659 = vadd.f32 %v626, %v627
      %660 = vadd.xlane.f32.xlu0 %v659
      %v661 = vpop.xlane.xlu0 %660
      %v662 = vadd.f32 %v628, %v629
      %663 = vadd.xlane.f32.xlu0 %v662
      %v664 = vpop.xlane.xlu0 %663
      %v665 = vadd.f32 %v630, %v631
      %666 = vadd.xlane.f32.xlu0 %v665
      %v667 = vpop.xlane.xlu0 %666
      %v668 = vadd.f32 %v632, %v633
      %669 = vadd.xlane.f32.xlu0 %v668
      %v670 = vpop.xlane.xlu0 %669
      %v671 = vadd.f32 %v634, %v635
      %672 = vadd.xlane.f32.xlu0 %v671
      %v673 = vpop.xlane.xlu0 %672
      %v674 = vadd.f32 %v636, %v637
      %675 = vadd.xlane.f32.xlu0 %v674
      %v676 = vpop.xlane.xlu0 %675
      %v677 = vadd.f32 %v638, %v639
      %678 = vadd.xlane.f32.xlu0 %v677
      %v679 = vpop.xlane.xlu0 %678
      %v680 = vadd.f32 %v640, %v641
      %681 = vadd.xlane.f32.xlu0 %v680
      %v682 = vpop.xlane.xlu0 %681
      %v683 = vadd.f32 %v642, %v643
      %684 = vadd.xlane.f32.xlu0 %v683
      %v685 = vpop.xlane.xlu0 %684
      %v686 = vadd.f32 %v644, %v645
      %687 = vadd.xlane.f32.xlu0 %v686
      %v688 = vpop.xlane.xlu0 %687
      %v689 = vadd.f32 %v646, %v647
      %690 = vadd.xlane.f32.xlu0 %v689
      %v691 = vpop.xlane.xlu0 %690
      %v692 = vadd.f32 %v648, %v649
      %693 = vadd.xlane.f32.xlu0 %v692
      %v694 = vpop.xlane.xlu0 %693
      %v695 = vadd.f32 %v650, %v651
      %696 = vadd.xlane.f32.xlu0 %v695
      %v697 = vpop.xlane.xlu0 %696
      %v698 = vadd.f32 %v652, %v653
      %699 = vadd.xlane.f32.xlu0 %v698
      %v700 = vpop.xlane.xlu0 %699
      %v701 = vadd.f32 %v654, %v655
      %702 = vadd.xlane.f32.xlu0 %v701
      %v703 = vpop.xlane.xlu0 %702
      %v704 = vrcp.pop 256.0
      %v705 = vmul.f32 256.0, %v704
      %v706 = vsub.f32 1.0, %v705
      %v707 = vmul.f32 %v704, %v706
      %v708 = vadd.f32 %v704, %v707
      %vm709 = vweird.f32 %v704
      %v710 = vsel %vm709, %v704, %v708
      %v711 = vmul.f32 %v658, %v710
      %v712 = vmul.f32 %v661, %v710
      %v713 = vmul.f32 %v664, %v710
      %v714 = vmul.f32 %v667, %v710
      %v715 = vmul.f32 %v670, %v710
      %v716 = vmul.f32 %v673, %v710
      %v717 = vmul.f32 %v676, %v710
      %v718 = vmul.f32 %v679, %v710
      %v719 = vmul.f32 %v682, %v710
      %v720 = vmul.f32 %v685, %v710
      %v721 = vmul.f32 %v688, %v710
      %v722 = vmul.f32 %v691, %v710
      %v723 = vmul.f32 %v694, %v710
      %v724 = vmul.f32 %v697, %v710
      %v725 = vmul.f32 %v700, %v710
      %v726 = vmul.f32 %v703, %v710
      %v727 = vadd.f32 %v711, 1e-06
      %v728 = vadd.f32 %v712, 1e-06
      %v729 = vadd.f32 %v713, 1e-06
      %v730 = vadd.f32 %v714, 1e-06
      %v731 = vadd.f32 %v715, 1e-06
      %v732 = vadd.f32 %v716, 1e-06
      %v733 = vadd.f32 %v717, 1e-06
      %v734 = vadd.f32 %v718, 1e-06
      %v735 = vadd.f32 %v719, 1e-06
      %v736 = vadd.f32 %v720, 1e-06
      %v737 = vadd.f32 %v721, 1e-06
      %v738 = vadd.f32 %v722, 1e-06
      %v739 = vadd.f32 %v723, 1e-06
      %v740 = vadd.f32 %v724, 1e-06
      %v741 = vadd.f32 %v725, 1e-06
      %v742 = vadd.f32 %v726, 1e-06
      %v743 = vrsqrt.pop %v727
      %v744 = vmul.f32 %v743, %v727
      %v745 = vmul.f32 %v744, %v743
      %v746 = vmul.f32 0.5, %v745
      %v747 = vsub.f32 1.5, %v746
      %v748 = vmul.f32 %v743, %v747
      %vm749 = vweird.f32 %v727
      %vm750 = vweird.f32 %v743
      %vm751 = vmor %vm749, %vm750
      %v752 = vsel %vm751, %v743, %v748
      %v753 = vrsqrt.pop %v728
      %v754 = vmul.f32 %v753, %v728
      %v755 = vmul.f32 %v754, %v753
      %v756 = vmul.f32 0.5, %v755
      %v757 = vsub.f32 1.5, %v756
      %v758 = vmul.f32 %v753, %v757
      %vm759 = vweird.f32 %v728
      %vm760 = vweird.f32 %v753
      %vm761 = vmor %vm759, %vm760
      %v762 = vsel %vm761, %v753, %v758
      %v763 = vrsqrt.pop %v729
      %v764 = vmul.f32 %v763, %v729
      %v765 = vmul.f32 %v764, %v763
      %v766 = vmul.f32 0.5, %v765
      %v767 = vsub.f32 1.5, %v766
      %v768 = vmul.f32 %v763, %v767
      %vm769 = vweird.f32 %v729
      %vm770 = vweird.f32 %v763
      %vm771 = vmor %vm769, %vm770
      %v772 = vsel %vm771, %v763, %v768
      %v773 = vrsqrt.pop %v730
      %v774 = vmul.f32 %v773, %v730
      %v775 = vmul.f32 %v774, %v773
      %v776 = vmul.f32 0.5, %v775
      %v777 = vsub.f32 1.5, %v776
      %v778 = vmul.f32 %v773, %v777
      %vm779 = vweird.f32 %v730
      %vm780 = vweird.f32 %v773
      %vm781 = vmor %vm779, %vm780
      %v782 = vsel %vm781, %v773, %v778
      %v783 = vrsqrt.pop %v731
      %v784 = vmul.f32 %v783, %v731
      %v785 = vmul.f32 %v784, %v783
      %v786 = vmul.f32 0.5, %v785
      %v787 = vsub.f32 1.5, %v786
      %v788 = vmul.f32 %v783, %v787
      %vm789 = vweird.f32 %v731
      %vm790 = vweird.f32 %v783
      %vm791 = vmor %vm789, %vm790
      %v792 = vsel %vm791, %v783, %v788
      %v793 = vrsqrt.pop %v732
      %v794 = vmul.f32 %v793, %v732
      %v795 = vmul.f32 %v794, %v793
      %v796 = vmul.f32 0.5, %v795
      %v797 = vsub.f32 1.5, %v796
      %v798 = vmul.f32 %v793, %v797
      %vm799 = vweird.f32 %v732
      %vm800 = vweird.f32 %v793
      %vm801 = vmor %vm799, %vm800
      %v802 = vsel %vm801, %v793, %v798
      %v803 = vrsqrt.pop %v733
      %v804 = vmul.f32 %v803, %v733
      %v805 = vmul.f32 %v804, %v803
      %v806 = vmul.f32 0.5, %v805
      %v807 = vsub.f32 1.5, %v806
      %v808 = vmul.f32 %v803, %v807
      %vm809 = vweird.f32 %v733
      %vm810 = vweird.f32 %v803
      %vm811 = vmor %vm809, %vm810
      %v812 = vsel %vm811, %v803, %v808
      %v813 = vrsqrt.pop %v734
      %v814 = vmul.f32 %v813, %v734
      %v815 = vmul.f32 %v814, %v813
      %v816 = vmul.f32 0.5, %v815
      %v817 = vsub.f32 1.5, %v816
      %v818 = vmul.f32 %v813, %v817
      %vm819 = vweird.f32 %v734
      %vm820 = vweird.f32 %v813
      %vm821 = vmor %vm819, %vm820
      %v822 = vsel %vm821, %v813, %v818
      %v823 = vrsqrt.pop %v735
      %v824 = vmul.f32 %v823, %v735
      %v825 = vmul.f32 %v824, %v823
      %v826 = vmul.f32 0.5, %v825
      %v827 = vsub.f32 1.5, %v826
      %v828 = vmul.f32 %v823, %v827
      %vm829 = vweird.f32 %v735
      %vm830 = vweird.f32 %v823
      %vm831 = vmor %vm829, %vm830
      %v832 = vsel %vm831, %v823, %v828
      %v833 = vrsqrt.pop %v736
      %v834 = vmul.f32 %v833, %v736
      %v835 = vmul.f32 %v834, %v833
      %v836 = vmul.f32 0.5, %v835
      %v837 = vsub.f32 1.5, %v836
      %v838 = vmul.f32 %v833, %v837
      %vm839 = vweird.f32 %v736
      %vm840 = vweird.f32 %v833
      %vm841 = vmor %vm839, %vm840
      %v842 = vsel %vm841, %v833, %v838
      %v843 = vrsqrt.pop %v737
      %v844 = vmul.f32 %v843, %v737
      %v845 = vmul.f32 %v844, %v843
      %v846 = vmul.f32 0.5, %v845
      %v847 = vsub.f32 1.5, %v846
      %v848 = vmul.f32 %v843, %v847
      %vm849 = vweird.f32 %v737
      %vm850 = vweird.f32 %v843
      %vm851 = vmor %vm849, %vm850
      %v852 = vsel %vm851, %v843, %v848
      %v853 = vrsqrt.pop %v738
      %v854 = vmul.f32 %v853, %v738
      %v855 = vmul.f32 %v854, %v853
      %v856 = vmul.f32 0.5, %v855
      %v857 = vsub.f32 1.5, %v856
      %v858 = vmul.f32 %v853, %v857
      %vm859 = vweird.f32 %v738
      %vm860 = vweird.f32 %v853
      %vm861 = vmor %vm859, %vm860
      %v862 = vsel %vm861, %v853, %v858
      %v863 = vrsqrt.pop %v739
      %v864 = vmul.f32 %v863, %v739
      %v865 = vmul.f32 %v864, %v863
      %v866 = vmul.f32 0.5, %v865
      %v867 = vsub.f32 1.5, %v866
      %v868 = vmul.f32 %v863, %v867
      %vm869 = vweird.f32 %v739
      %vm870 = vweird.f32 %v863
      %vm871 = vmor %vm869, %vm870
      %v872 = vsel %vm871, %v863, %v868
      %v873 = vrsqrt.pop %v740
      %v874 = vmul.f32 %v873, %v740
      %v875 = vmul.f32 %v874, %v873
      %v876 = vmul.f32 0.5, %v875
      %v877 = vsub.f32 1.5, %v876
      %v878 = vmul.f32 %v873, %v877
      %vm879 = vweird.f32 %v740
      %vm880 = vweird.f32 %v873
      %vm881 = vmor %vm879, %vm880
      %v882 = vsel %vm881, %v873, %v878
      %v883 = vrsqrt.pop %v741
      %v884 = vmul.f32 %v883, %v741
      %v885 = vmul.f32 %v884, %v883
      %v886 = vmul.f32 0.5, %v885
      %v887 = vsub.f32 1.5, %v886
      %v888 = vmul.f32 %v883, %v887
      %vm889 = vweird.f32 %v741
      %vm890 = vweird.f32 %v883
      %vm891 = vmor %vm889, %vm890
      %v892 = vsel %vm891, %v883, %v888
      %v893 = vrsqrt.pop %v742
      %v894 = vmul.f32 %v893, %v742
      %v895 = vmul.f32 %v894, %v893
      %v896 = vmul.f32 0.5, %v895
      %v897 = vsub.f32 1.5, %v896
      %v898 = vmul.f32 %v893, %v897
      %vm899 = vweird.f32 %v742
      %vm900 = vweird.f32 %v893
      %vm901 = vmor %vm899, %vm900
      %v902 = vsel %vm901, %v893, %v898
      %v903 = vmul.f32 %v592, %v752
      %v904 = vmul.f32 %v593, %v752
      %v905 = vmul.f32 %v594, %v762
      %v906 = vmul.f32 %v595, %v762
      %v907 = vmul.f32 %v596, %v772
      %v908 = vmul.f32 %v597, %v772
      %v909 = vmul.f32 %v598, %v782
      %v910 = vmul.f32 %v599, %v782
      %v911 = vmul.f32 %v600, %v792
      %v912 = vmul.f32 %v601, %v792
      %v913 = vmul.f32 %v602, %v802
      %v914 = vmul.f32 %v603, %v802
      %v915 = vmul.f32 %v604, %v812
      %v916 = vmul.f32 %v605, %v812
      %v917 = vmul.f32 %v606, %v822
      %v918 = vmul.f32 %v607, %v822
      %v919 = vmul.f32 %v608, %v832
      %v920 = vmul.f32 %v609, %v832
      %v921 = vmul.f32 %v610, %v842
      %v922 = vmul.f32 %v611, %v842
      %v923 = vmul.f32 %v612, %v852
      %v924 = vmul.f32 %v613, %v852
      %v925 = vmul.f32 %v614, %v862
      %v926 = vmul.f32 %v615, %v862
      %v927 = vmul.f32 %v616, %v872
      %v928 = vmul.f32 %v617, %v872
      %v929 = vmul.f32 %v618, %v882
      %v930 = vmul.f32 %v619, %v882
      %v931 = vmul.f32 %v620, %v892
      %v932 = vmul.f32 %v621, %v892
      %v933 = vmul.f32 %v622, %v902
      %v934 = vmul.f32 %v623, %v902
      %v935 = vld [vmem:[%s3] sm:$0x3]
      %v937 = vperm.slane %v935, 0
      %v938 = vperm.slane %v935, 1
      %v941 = vmul.f32 %v903, %v937
      %v942 = vmul.f32 %v904, %v938
      %v943 = vmul.f32 %v905, %v937
      %v944 = vmul.f32 %v906, %v938
      %v945 = vmul.f32 %v907, %v937
      %v946 = vmul.f32 %v908, %v938
      %v947 = vmul.f32 %v909, %v937
      %v948 = vmul.f32 %v910, %v938
      %v949 = vmul.f32 %v911, %v937
      %v950 = vmul.f32 %v912, %v938
      %v951 = vmul.f32 %v913, %v937
      %v952 = vmul.f32 %v914, %v938
      %v953 = vmul.f32 %v915, %v937
      %v954 = vmul.f32 %v916, %v938
      %v955 = vmul.f32 %v917, %v937
      %v956 = vmul.f32 %v918, %v938
      %v957 = vmul.f32 %v919, %v937
      %v958 = vmul.f32 %v920, %v938
      %v959 = vmul.f32 %v921, %v937
      %v960 = vmul.f32 %v922, %v938
      %v961 = vmul.f32 %v923, %v937
      %v962 = vmul.f32 %v924, %v938
      %v963 = vmul.f32 %v925, %v937
      %v964 = vmul.f32 %v926, %v938
      %v965 = vmul.f32 %v927, %v937
      %v966 = vmul.f32 %v928, %v938
      %v967 = vmul.f32 %v929, %v937
      %v968 = vmul.f32 %v930, %v938
      %v969 = vmul.f32 %v931, %v937
      %v970 = vmul.f32 %v932, %v938
      %v971 = vmul.f32 %v933, %v937
      %v972 = vmul.f32 %v934, %v938
      %973 = vst [vmem:[#allocation9] sm:$0xff] %v941
      %974 = vst [vmem:[#allocation9 + $0x8] sm:$0xff] %v942
      %975 = vst [vmem:[#allocation9 + $0x10] sm:$0xff] %v943
      %976 = vst [vmem:[#allocation9 + $0x18] sm:$0xff] %v944
      %977 = vst [vmem:[#allocation9 + $0x20] sm:$0xff] %v945
      %978 = vst [vmem:[#allocation9 + $0x28] sm:$0xff] %v946
      %979 = vst [vmem:[#allocation9 + $0x30] sm:$0xff] %v947
      %980 = vst [vmem:[#allocation9 + $0x38] sm:$0xff] %v948
      %981 = vst [vmem:[#allocation9 + $0x40] sm:$0xff] %v949
      %982 = vst [vmem:[#allocation9 + $0x48] sm:$0xff] %v950
      %983 = vst [vmem:[#allocation9 + $0x50] sm:$0xff] %v951
      %984 = vst [vmem:[#allocation9 + $0x58] sm:$0xff] %v952
      %985 = vst [vmem:[#allocation9 + $0x60] sm:$0xff] %v953
      %986 = vst [vmem:[#allocation9 + $0x68] sm:$0xff] %v954
      %987 = vst [vmem:[#allocation9 + $0x70] sm:$0xff] %v955
      %988 = vst [vmem:[#allocation9 + $0x78] sm:$0xff] %v956
      %989 = vst [vmem:[#allocation9 + $0x80] sm:$0xff] %v957
      %990 = vst [vmem:[#allocation9 + $0x88] sm:$0xff] %v958
      %991 = vst [vmem:[#allocation9 + $0x90] sm:$0xff] %v959
      %992 = vst [vmem:[#allocation9 + $0x98] sm:$0xff] %v960
      %993 = vst [vmem:[#allocation9 + $0xa0] sm:$0xff] %v961
      %994 = vst [vmem:[#allocation9 + $0xa8] sm:$0xff] %v962
      %995 = vst [vmem:[#allocation9 + $0xb0] sm:$0xff] %v963
      %996 = vst [vmem:[#allocation9 + $0xb8] sm:$0xff] %v964
      %997 = vst [vmem:[#allocation9 + $0xc0] sm:$0xff] %v965
      %998 = vst [vmem:[#allocation9 + $0xc8] sm:$0xff] %v966
      %999 = vst [vmem:[#allocation9 + $0xd0] sm:$0xff] %v967
      %1000 = vst [vmem:[#allocation9 + $0xd8] sm:$0xff] %v968
      %1001 = vst [vmem:[#allocation9 + $0xe0] sm:$0xff] %v969
      %1002 = vst [vmem:[#allocation9 + $0xe8] sm:$0xff] %v970
      %1003 = vst [vmem:[#allocation9 + $0xf0] sm:$0xff] %v971
      %1004 = vst [vmem:[#allocation9 + $0xf8] sm:$0xff] %v972
    $region37: #{tpu_custom_call.1} parent=1 // pred_fallthru
      _
    // Predicated region
    $region38: #{tpu_custom_call.1} parent=1 // pred_check
      _
    $region39: #{tpu_custom_call.1} parent=1 // pred_check_branch
      %1006 = sbr.rel (0) target = $region41
    $region40: #{tpu_custom_call.1} parent=1 // pred_region
      %1008 = vsyncadd [#allocation5], 0
      %s1009 = sshll.u32 [#allocation9], 4
      %s1010 = int_to_ptr.vmem [resolvable:$true] %s1009
      %s1011 = sshll.u32 %s4, 4
      %s1012 = int_to_ptr.hbm [resolvable:$true] %s1011
      %1017 = dma.vmem_to_hbm [thread:$0]  %s1010, 4096, %s1012, [#allocation5], 256, 256, 16
    $region41: #{tpu_custom_call.1} parent=1 // pred_fallthru
      _
    // Predicated region
    $region42: #{tpu_custom_call.1} parent=1 // pred_check
      _
    $region43: #{tpu_custom_call.1} parent=1 // pred_check_branch
      %1019 = sbr.rel (0) target = $region45
    $region44: #{tpu_custom_call.1} parent=1 // pred_region
      %1021 = dma.done [#allocation5], 4096
    $region45: #{tpu_custom_call.1} parent=1 // pred_fallthru
      _
    %1022 = vsyncpa [#allocation4], 1
    %1023 = vsyncpa [#allocation7], 1
    %1024 = vsyncpa [#allocation5], 1

</llo_original>
